<compile_context>
chip_gen: v7x
topology: tpu7x:2x2x1
jax: 0.10.0
libtpu: 0.0.40
codegen_flags: <defaults>
</compile_context>

<pallas_src>
import jax
import jax.numpy as jnp
from jax.experimental import pallas as pl
from jax.experimental.pallas import tpu as pltpu


# --------------------------------------------------------------------------
# Kernel 1: one-time projection P = features @ W1   (layer-1 linearity hoist)
# --------------------------------------------------------------------------
def project_w1_kernel(x_ref, w1_ref, p_ref):
    # x_ref: (N, B, H), w1_ref: (H, C), p_ref: (N, B, C)
    n, b, h = x_ref.shape
    c = w1_ref.shape[1]
    x2 = x_ref[...].reshape(n * b, h)                       # leading-dim merge only
    p = jnp.dot(x2, w1_ref[...], preferred_element_type=jnp.float32)
    p_ref[...] = p.reshape(n, b, c).astype(p_ref.dtype)


def _project_w1(features, w1):
    """P = features @ W1, kept in f32 for the downstream subtraction."""
    n, b, _ = features.shape
    c = w1.shape[1]
    # Whole problem in one invocation: this GEMM is O(N*B*H*C), negligible vs
    # the O(N^2*B) main kernel.  At production N it would be trivially tiled
    # over the node axis.
    return pl.pallas_call(
        project_w1_kernel,
        out_shape=jax.ShapeDtypeStruct((n, b, c), jnp.float32),
    )(features.astype(jnp.float32), w1.astype(jnp.float32))


# --------------------------------------------------------------------------
# Kernel 2: pairwise edge classifier on a 2-D (i, j) node grid
# --------------------------------------------------------------------------
def edges_kernel(pi_ref, pj_ref, b1_ref, w2_ref, b2_ref, out_ref):
    # pi_ref: (TI, B, C)  P tile for the row nodes i
    # pj_ref: (TJ, B, C)  P tile for the column nodes j
    # b1_ref: (1, C), w2_ref: (C, C), b2_ref: (1, C)
    # out_ref: (TI, TJ*B, C)   natural C-minor layout (no in-kernel relayout)
    ti, b, c = pi_ref.shape
    tj = pj_ref.shape[0]

    # diff[i, j, b, :] = P_i[b] - P_j[b]; merge leading dims only (C stays on
    # the lanes), then bias + ReLU on the VPU.
    diff = (pi_ref[...][:, None, :, :] - pj_ref[...][None, :, :, :]).reshape(
        ti * tj * b, c)
    h1 = jnp.maximum(diff + b1_ref[...], 0.0)
    # TODO(synk): training-mode dropout (pltpu.prng_seed / prng_random_bits
    # mask) not implemented; eval-mode dropout is the identity.

    logits = jnp.dot(h1, w2_ref[...], preferred_element_type=jnp.float32)
    logits = logits + b2_ref[...]

    out_ref[...] = logits.reshape(ti, tj * b, c).astype(out_ref.dtype)


# --------------------------------------------------------------------------
# Tiling / VMEM heuristics
# --------------------------------------------------------------------------
def _pick_tiles(n, b, c, out_elem_bytes, tile_i=None, tile_j=None):
    """Tile the (i, j) node axes.

    i ("parallel"): keep >= 2 grid steps when possible so v7x's two
        TensorCores both get work.
    j ("arbitrary"): grow the tile until the per-step output block reaches a
        writeback target (~256 KiB) while its double buffer stays well inside
        a conservative VMEM budget.  The op is HBM-write bound, so per-step
        output bytes — not GEMM rows — is the quantity to size for.
    """
    divisors = [d for d in range(1, n + 1) if n % d == 0]

    if tile_i is None:
        cands = [d for d in divisors if n // d >= 2] or [n]
        tile_i = max(cands)
    assert n % tile_i == 0

    if tile_j is None:
        target_step_bytes = 256 * 1024        # per-step HBM writeback target
        out_vmem_budget = 8 * 2 ** 20         # double-buffered out-block budget
        tile_j = divisors[0]
        for d in divisors:
            blk = tile_i * d * b * c * out_elem_bytes
            if 2 * blk <= out_vmem_budget:
                tile_j = d
                if blk >= target_step_bytes:
                    break
    assert n % tile_j == 0

    return tile_i, tile_j


def _vmem_limit_bytes(ti, tj, b, c, out_elem_bytes):
    """Scoped-VMEM limit sized to the actual blocks, with generous headroom."""
    f32 = 4
    streams = 2 * (ti * b * c + tj * b * c) * f32        # double-buffered P tiles
    consts = 2 * (c * c + 2 * c) * f32                   # W2, b1, b2 (double-buffered)
    outblk = 2 * ti * tj * b * c * out_elem_bytes        # double-buffered output block
    est = streams + consts + outblk
    # Never below the common 32 MiB default, never above v7x's 64 MiB physical.
    return int(min(64 * 2 ** 20, max(32 * 2 ** 20, 4 * est)))


# --------------------------------------------------------------------------
# Forward pass wrapper
# --------------------------------------------------------------------------
def edges_class_forward(features, w1, b1, w2, b2, *,
                        tile_i=None, tile_j=None, out_dtype=None):
    """features: (N, B, H); w1: (H, C); b1: (C,); w2: (C, C); b2: (C,).

    Returns logits of shape (N, N, B, C).  `out_dtype=jnp.bfloat16` halves
    HBM writeback at production sizes (f32 accumulation is kept internally).
    """
    n, b, _ = features.shape
    c = w1.shape[1]
    out_dtype = features.dtype if out_dtype is None else out_dtype
    out_elem_bytes = jnp.dtype(out_dtype).itemsize

    # Layer-1 linearity hoist: P = features @ W1 (small one-time Pallas GEMM).
    p = _project_w1(features, w1)                              # (N, B, C) f32

    ti, tj = _pick_tiles(n, b, c, out_elem_bytes, tile_i, tile_j)
    b1_2d = b1.reshape(1, c).astype(jnp.float32)
    b2_2d = b2.reshape(1, c).astype(jnp.float32)

    out = pl.pallas_call(
        edges_kernel,
        out_shape=jax.ShapeDtypeStruct((n, n * b, c), out_dtype),
        grid_spec=pltpu.PrefetchScalarGridSpec(
            num_scalar_prefetch=0,
            grid=(n // ti, n // tj),
            in_specs=[
                # P tile for row nodes: constant along j -> fetched once per i row.
                pl.BlockSpec((ti, b, c), lambda i, j: (i, 0, 0)),
                # P tile for column nodes: streamed along j.
                pl.BlockSpec((tj, b, c), lambda i, j: (j, 0, 0)),
                pl.BlockSpec((1, c), lambda i, j: (0, 0)),     # b1
                pl.BlockSpec((c, c), lambda i, j: (0, 0)),     # W2
                pl.BlockSpec((1, c), lambda i, j: (0, 0)),     # b2
            ],
            # C-minor output block; last dim equals the full array dim (legal),
            # second-last (TJ*B) is a multiple of 8.  No in-kernel relayout.
            out_specs=pl.BlockSpec((ti, tj * b, c), lambda i, j: (i, j, 0)),
        ),
        compiler_params=pltpu.CompilerParams(
            dimension_semantics=("parallel", "arbitrary"),
            vmem_limit_bytes=_vmem_limit_bytes(ti, tj, b, c, out_elem_bytes),
        ),
    )(p, p, b1_2d, w2, b2_2d)

    # Row-major, free metadata reshape in XLA: (N, N*B, C) -> (N, N, B, C).
    return out.reshape(n, n, b, c)


# --------------------------------------------------------------------------
# Self-test
# --------------------------------------------------------------------------
if __name__ == "__main__":
    # Small shapes consistent with the module: num_nodes=8, batch=4,
    # hidden_dim=32, num_classes=16, num_layers=0, eval mode.
    N, B, H, C = 8, 4, 32, 16

    key = jax.random.PRNGKey(0)
    k1, k2, k3, k4, k5 = jax.random.split(key, 5)

    features = jax.random.normal(k1, (N, B, H), jnp.float32)

    # Deterministic parameter init (PyTorch Linear-style uniform bounds).
    bound1 = 1.0 / (H ** 0.5)
    w1 = jax.random.uniform(k2, (H, C), jnp.float32, -bound1, bound1)
    b1 = jax.random.uniform(k3, (C,), jnp.float32, -bound1, bound1)
    bound2 = 1.0 / (C ** 0.5)
    w2 = jax.random.uniform(k4, (C, C), jnp.float32, -bound2, bound2)
    b2 = jax.random.uniform(k5, (C,), jnp.float32, -bound2, bound2)

    # Pure-JAX reference in the original PyTorch op order (eval-mode dropout = id).
    diff = features[:, None, :, :] - features[None, :, :, :]      # (N, N, B, H)
    ref = jnp.maximum(diff.reshape(-1, H) @ w1 + b1, 0.0) @ w2 + b2
    ref = ref.reshape(N, N, B, C)

    # 1) Auto-picked tiling (grid_i >= 2 for megacore).
    out = jax.block_until_ready(edges_class_forward(features, w1, b1, w2, b2))
    assert out.shape == (N, N, B, C)
    assert jnp.allclose(out, ref, atol=1e-5, rtol=1e-5)

    # 2) Explicit small tiles to exercise multi-step i AND j grid axes.
    out2 = jax.block_until_ready(
        edges_class_forward(features, w1, b1, w2, b2, tile_i=2, tile_j=2))
    assert out2.shape == (N, N, B, C)
    assert jnp.allclose(out2, ref, atol=1e-5, rtol=1e-5)

    print("KERNEL_OK")
</pallas_src>

<mosaic_0001>
module attributes {stable_mosaic.version = 11 : i64} {
  func.func @project_w1_kernel(%arg0: memref<8x4x32xf32, #tpu.memory_space<vmem>>, %arg1: memref<32x16xf32, #tpu.memory_space<vmem>>, %arg2: memref<8x4x16xf32, #tpu.memory_space<vmem>>) attributes {dimension_semantics = [], scalar_prefetch = 0 : i64, scratch_operands = 0 : i64, tpu.core_type = #tpu.core_type<tc>} {
    %c0 = arith.constant 0 : index
    %c0_0 = arith.constant 0 : index
    %c0_1 = arith.constant 0 : index
    %0 = vector.load %arg0[%c0, %c0_0, %c0_1] : memref<8x4x32xf32, #tpu.memory_space<vmem>>, vector<8x4x32xf32>
    %1 = vector.shape_cast %0 : vector<8x4x32xf32> to vector<32x32xf32>
    %c0_2 = arith.constant 0 : index
    %c0_3 = arith.constant 0 : index
    %2 = vector.load %arg1[%c0_2, %c0_3] : memref<32x16xf32, #tpu.memory_space<vmem>>, vector<32x16xf32>
    %cst = arith.constant dense<0.000000e+00> : vector<32x16xf32>
    %3 = tpu.matmul %1, %2, %cst {dimension_numbers = #tpu.dot_dimension_numbers<[1], [0], [0], [1], [0, 0, 1, 1], [], []>} : vector<32x32xf32>, vector<32x16xf32>, vector<32x16xf32> -> vector<32x16xf32>
    %4 = vector.shape_cast %3 : vector<32x16xf32> to vector<8x4x16xf32>
    %c0_4 = arith.constant 0 : index
    %c0_5 = arith.constant 0 : index
    %c0_6 = arith.constant 0 : index
    %5 = vector.load %arg2[%c0_4, %c0_5, %c0_6] : memref<8x4x16xf32, #tpu.memory_space<vmem>>, vector<8x4x16xf32>
    tpu.vector_store %arg2[%c0_4, %c0_5, %c0_6], %4 {strides = array<i32>} : memref<8x4x16xf32, #tpu.memory_space<vmem>>, vector<8x4x16xf32>,
    return
  }
}

</mosaic_0001>

<llo_original>
// kernel: tpu_custom_call.1
$region0: #{tpu_custom_call.1}
  #allocation0 [shape = 'u32[]', space=smem, size = 0x4, offset = 0x4, fixed_abs, tag = 'smem constant byte address 0x4 - core index']
  #allocation1 [shape = 'u32[144,128]{1,0:T(1,128)}', space=vmem, size = 0x12000, scoped, tag = 'internal scratch']
  %s0 = inlined_call_operand.vmem [shape: f32[8,4,32], index: 0, kind: input, shape index: {}]
  %s1 = inlined_call_operand.vmem [shape: f32[32,16], index: 1, kind: input, shape index: {}]
  %s2 = inlined_call_operand.hbm [shape: f32[8,4,16], index: 2, kind: output, shape index: {}]
  %s3 = sld [smem:[#allocation0]]
  $region18: #{tpu_custom_call.1} parent=0
    _
  %s5 = ssub.s32 1, %s3
  %s6 = scalar_select 0, %s5, %s3
  $region1: #{tpu_custom_call.1} parent=0
    #allocation2 [shape = 'u8[16384]{0}', space=vmem, size = 0x4000, scoped, tag = 'output window, operand 0, single buffered']
    #allocation3 [shape = 's32[1]{0}', space=sflag, size = 0x4, scoped, tag = 'scoped memory for tpu_custom_call.1']
    %7 = vsyncpa [#allocation3], 0
    // Predicated region
    $region2: #{tpu_custom_call.1} parent=1 // pred_check
      _
    $region3: #{tpu_custom_call.1} parent=1 // pred_check_branch
      %9 = sbr.rel (0) target = $region5
    $region4: #{tpu_custom_call.1} parent=1 // pred_region
      _
    $region5: #{tpu_custom_call.1} parent=1 // pred_fallthru
      _
    // Predicated region
    $region6: #{tpu_custom_call.1} parent=1 // pred_check
      _
    $region7: #{tpu_custom_call.1} parent=1 // pred_check_branch
      %11 = sbr.rel (0) target = $region9
    $region8: #{tpu_custom_call.1} parent=1 // pred_region
      _
    $region9: #{tpu_custom_call.1} parent=1 // pred_fallthru
      _
    %v12 = vld [vmem:[%s0] sm:$0xf]
    %v13 = vld [vmem:[%s0 + $0x4] sm:$0xf]
    %v14 = vld [vmem:[%s0 + $0x8] sm:$0xf]
    %v15 = vld [vmem:[%s0 + $0xc] sm:$0xf]
    %v16 = vld [vmem:[%s0 + $0x10] sm:$0xf]
    %v17 = vld [vmem:[%s0 + $0x14] sm:$0xf]
    %v18 = vld [vmem:[%s0 + $0x18] sm:$0xf]
    %v19 = vld [vmem:[%s0 + $0x1c] sm:$0xf]
    %v20 = vld [vmem:[%s1] sm:$0xff]
    %v21 = vld [vmem:[%s1 + $0x8] sm:$0xff]
    %v22 = vld [vmem:[%s1 + $0x10] sm:$0xff]
    %v23 = vld [vmem:[%s1 + $0x18] sm:$0xff]
    %v32 = vcombine.low %v12, %v13
    %v33 = vcombine.low %v14, %v15
    %v34 = vcombine.low %v16, %v17
    %v35 = vcombine.low %v18, %v19
    %vm36 = vcmask 261120
    %v37 = vsel %vm36, %v32, 0
    %v39 = vsel %vm36, %v33, 0
    %v41 = vsel %vm36, %v34, 0
    %v43 = vsel %vm36, %v35, 0
    %45 = vmatprep.subr.mxu0 0.0
    %46 = vmatpush1.msra.mxu0 %v20
    %47 = vmatprep.subr.mxu0 0.0
    %48 = vmatpush1.msra.mxu0 %v21
    %49 = vmatprep.subr.mxu0 0.0
    %50 = vmatpush1.msra.mxu0 %v22
    %51 = vmatprep.subr.mxu0 0.0
    %52 = vmatpush1.msra.mxu0 %v23
    %53 = vmatprep.subr.mxu0 0.0
    %54 = vmatpush1.msra.mxu0 0.0
    %55 = vmatprep.subr.mxu0 0.0
    %56 = vmatpush1.msra.mxu0 0.0
    %57 = vmatprep.subr.mxu0 0.0
    %58 = vmatpush1.msra.mxu0 0.0
    %59 = vmatprep.subr.mxu0 0.0
    %60 = vmatpush1.msra.mxu0 0.0
    %61 = vmatprep.subr.mxu0 0.0
    %62 = vmatpush1.msra.mxu0 0.0
    %63 = vmatprep.subr.mxu0 0.0
    %64 = vmatpush1.msra.mxu0 0.0
    %65 = vmatprep.subr.mxu0 0.0
    %66 = vmatpush1.msra.mxu0 0.0
    %67 = vmatprep.subr.mxu0 0.0
    %68 = vmatpush1.msra.mxu0 0.0
    %69 = vmatprep.subr.mxu0 0.0
    %70 = vmatpush1.msra.mxu0 0.0
    %71 = vmatprep.subr.mxu0 0.0
    %72 = vmatpush1.msra.mxu0 0.0
    %73 = vmatprep.subr.mxu0 0.0
    %74 = vmatpush1.msra.mxu0 0.0
    %75 = vmatprep.subr.mxu0 0.0
    %76 = vmatpush1.msra.mxu0 0.0
    %77 = vmatprep.subr.mxu0 0.0
    %78 = vmatpush1.msra.mxu0 0.0
    %79 = vmatprep.subr.mxu0 0.0
    %80 = vmatpush1.msra.mxu0 0.0
    %81 = vmatprep.subr.mxu0 0.0
    %82 = vmatpush1.msra.mxu0 0.0
    %83 = vmatprep.subr.mxu0 0.0
    %84 = vmatpush1.msra.mxu0 0.0
    %85 = vmatprep.subr.mxu0 0.0
    %86 = vmatpush1.msra.mxu0 0.0
    %87 = vmatprep.subr.mxu0 0.0
    %88 = vmatpush1.msra.mxu0 0.0
    %89 = vmatprep.subr.mxu0 0.0
    %90 = vmatpush1.msra.mxu0 0.0
    %91 = vmatprep.subr.mxu0 0.0
    %92 = vmatpush1.msra.mxu0 0.0
    %93 = vmatprep.subr.mxu0 0.0
    %94 = vmatpush1.msra.mxu0 0.0
    %95 = vmatprep.subr.mxu0 0.0
    %96 = vmatpush1.msra.mxu0 0.0
    %97 = vmatprep.subr.mxu0 0.0
    %98 = vmatpush1.msra.mxu0 0.0
    %99 = vmatprep.subr.mxu0 0.0
    %100 = vmatpush1.msra.mxu0 0.0
    %101 = vmatprep.subr.mxu0 0.0
    %102 = vmatpush1.msra.mxu0 0.0
    %103 = vmatprep.subr.mxu0 0.0
    %104 = vmatpush1.msra.mxu0 0.0
    %105 = vmatprep.subr.mxu0 0.0
    %106 = vmatpush1.msra.mxu0 0.0
    %107 = vmatprep.subr.mxu0 0.0
    %108 = vmatpush1.msra.mxu0 0.0
    %109 = vmatprep.mubr.f32.mxu0 0.0
    %110 = vmatmul.mubr.f32.gmra.mrb[0].mxu0 %v37
    %v111 = vpop.f32.mrb[0].mxu0
    %v112 = vadd.f32 0.0, %v111
    %v113 = vpop.f32.mrb[0].mxu0
    %114 = vmatprep.mubr.f32.mxu0 0.0
    %115 = vmatmul.mubr.f32.gmra.mrb[0].mxu0 %v39
    %v116 = vpop.f32.mrb[0].mxu0
    %v117 = vadd.f32 0.0, %v116
    %v118 = vpop.f32.mrb[0].mxu0
    %119 = vmatprep.mubr.f32.mxu0 0.0
    %120 = vmatmul.mubr.f32.gmra.mrb[0].mxu0 %v41
    %v121 = vpop.f32.mrb[0].mxu0
    %v122 = vadd.f32 0.0, %v121
    %v123 = vpop.f32.mrb[0].mxu0
    %124 = vmatprep.mubr.f32.mxu0 0.0
    %125 = vmatmul.mubr.f32.gmra.mrb[0].mxu0 %v43
    %v126 = vpop.f32.mrb[0].mxu0
    %v127 = vadd.f32 0.0, %v126
    %v128 = vpop.f32.mrb[0].mxu0
    %129 = vdwg.mxu0
    %v134 = vcombine.high %v112, %v112
    %v135 = vcombine.high %v117, %v117
    %v136 = vcombine.high %v122, %v122
    %v137 = vcombine.high %v127, %v127
    %vm142 = vcmask 125952
    %143 = vst.msk [vmem:[#allocation2] sm:$0xf] %vm142, %v112
    %144 = vst.msk [vmem:[#allocation2 + $0x4] sm:$0xf] %vm142, %v134
    %145 = vst.msk [vmem:[#allocation2 + $0x8] sm:$0xf] %vm142, %v117
    %146 = vst.msk [vmem:[#allocation2 + $0xc] sm:$0xf] %vm142, %v135
    %147 = vst.msk [vmem:[#allocation2 + $0x10] sm:$0xf] %vm142, %v122
    %148 = vst.msk [vmem:[#allocation2 + $0x14] sm:$0xf] %vm142, %v136
    %149 = vst.msk [vmem:[#allocation2 + $0x18] sm:$0xf] %vm142, %v127
    %150 = vst.msk [vmem:[#allocation2 + $0x1c] sm:$0xf] %vm142, %v137
    // Predicated region
    $region10: #{tpu_custom_call.1} parent=1 // pred_check
      _
    $region11: #{tpu_custom_call.1} parent=1 // pred_check_branch
      %152 = sbr.rel (0) target = $region13
    $region12: #{tpu_custom_call.1} parent=1 // pred_region
      %s154 = ssub.s32 512, 512
      %155 = vsyncadd [#allocation3], %s154
      %s156 = sshll.u32 [#allocation2], 4
      %s157 = int_to_ptr.vmem [resolvable:$true] %s156
      %162 = dma.vmem_to_hbm [thread:$0]  %s157, 512, %s2, [#allocation3], 64, 64, 4
    $region13: #{tpu_custom_call.1} parent=1 // pred_fallthru
      _
    // Predicated region
    $region14: #{tpu_custom_call.1} parent=1 // pred_check
      _
    $region15: #{tpu_custom_call.1} parent=1 // pred_check_branch
      %164 = sbr.rel (0) target = $region17
    $region16: #{tpu_custom_call.1} parent=1 // pred_region
      %165 = dma.done [#allocation3], 512
    $region17: #{tpu_custom_call.1} parent=1 // pred_fallthru
      _
    %166 = vsyncpa [#allocation3], 1

</llo_original>
